<compile_context>
chip_gen: v5e
topology: v5e:2x2
jax: 0.10.0
libtpu: 0.0.40
codegen_flags: <defaults>
</compile_context>

<pallas_src>
import functools

import jax
import jax.numpy as jnp
from jax.experimental import pallas as pl
from jax.experimental.pallas import tpu as pltpu

EPS = 1e-8  # matches torch.cosine_similarity eps


def _round_up(x, m):
    return ((x + m - 1) // m) * m


# ---------------------------------------------------------------------------
# Kernel: per batch-tile, compute clipped cosine similarities against all
# positives / negatives and reduce to min_p cos_p and max_n cos_n.
# ---------------------------------------------------------------------------
def _triplet_cos_kernel(anc_ref, pos_ref, neg_ref, cpmin_ref, cnmax_ref):
    anc = anc_ref[...]                                              # (TB, D)
    anc_norm = jnp.sqrt(jnp.sum(anc * anc, axis=-1, keepdims=True))  # (TB, 1)

    def clipped_cos(x):                                             # (TB, K, D)
        dots = jnp.sum(anc[:, None, :] * x, axis=-1)                # (TB, K)
        xnorm = jnp.sqrt(jnp.sum(x * x, axis=-1))                   # (TB, K)
        c = dots / jnp.maximum(anc_norm * xnorm, EPS)
        return jnp.clip(c, -1.0, 1.0)

    cpmin_ref[...] = jnp.min(clipped_cos(pos_ref[...]), axis=-1, keepdims=True)
    cnmax_ref[...] = jnp.max(clipped_cos(neg_ref[...]), axis=-1, keepdims=True)


def _cos_extrema(anc, poses, neges):
    """Returns (min_p clipped cos(anc, pos), max_n clipped cos(anc, neg))."""
    b, d = anc.shape
    p = poses.shape[1]
    n = neges.shape[1]

    tb = min(64, _round_up(b, 8))          # batch tile (sublane-aligned)
    b_pad = _round_up(b, tb)
    if b_pad != b:
        pad = b_pad - b                    # zero rows -> cos = 0, sliced off below
        anc = jnp.pad(anc, ((0, pad), (0, 0)))
        poses = jnp.pad(poses, ((0, pad), (0, 0), (0, 0)))
        neges = jnp.pad(neges, ((0, pad), (0, 0), (0, 0)))

    grid = (b_pad // tb,)
    cp_min, cn_max = pl.pallas_call(
        _triplet_cos_kernel,
        out_shape=(
            jax.ShapeDtypeStruct((b_pad, 1), jnp.float32),
            jax.ShapeDtypeStruct((b_pad, 1), jnp.float32),
        ),
        grid_spec=pltpu.PrefetchScalarGridSpec(
            num_scalar_prefetch=0,
            grid=grid,
            in_specs=[
                pl.BlockSpec((tb, d), lambda i: (i, 0)),
                pl.BlockSpec((tb, p, d), lambda i: (i, 0, 0)),
                pl.BlockSpec((tb, n, d), lambda i: (i, 0, 0)),
            ],
            out_specs=[
                pl.BlockSpec((tb, 1), lambda i: (i, 0)),
                pl.BlockSpec((tb, 1), lambda i: (i, 0)),
            ],
        ),
        compiler_params=pltpu.CompilerParams(
            dimension_semantics=("parallel",),   # batch tiles independent -> 2 TCs on v7x
        ),
    )(anc, poses, neges)
    return cp_min[:b, 0], cn_max[:b, 0]


# ---------------------------------------------------------------------------
# Forward (same semantics as the PyTorch module)
# ---------------------------------------------------------------------------
@functools.partial(jax.jit, static_argnames=("margin",))
def multi_arccosine_triplet_loss_soft_margin_hard(anc, poses, neges, margin=0.2):
    anc = anc.astype(jnp.float32)
    poses = poses.astype(jnp.float32)
    neges = neges.astype(jnp.float32)

    cp_min, cn_max = _cos_extrema(anc, poses, neges)   # (B,), (B,)

    # acos is monotone decreasing: max_p acos(c_p)=acos(min_p c_p), etc.
    d_p = jnp.arccos(cp_min)
    d_n = jnp.arccos(cn_max)
    div = d_p - d_n + margin
    hinge = jnp.maximum(div, 0.0)          # torch.max(cat([div, 0]), dim=1)[0]
    return jnp.mean(jnp.log1p(jnp.exp(hinge)))


# ---------------------------------------------------------------------------
# Pure-JAX reference (mirrors the PyTorch forward exactly)
# ---------------------------------------------------------------------------
def ref_loss(anc, poses, neges, margin=0.2):
    def cos(a, x):                          # a: (B, D), x: (B, K, D)
        dot = jnp.einsum("bd,bkd->bk", a, x)
        na = jnp.sqrt(jnp.sum(a * a, axis=-1, keepdims=True))
        nx = jnp.sqrt(jnp.sum(x * x, axis=-1))
        return dot / jnp.maximum(na * nx, EPS)

    c_p = jnp.clip(cos(anc, poses), -1.0, 1.0)
    c_n = jnp.clip(cos(anc, neges), -1.0, 1.0)
    d_p = jnp.max(jnp.arccos(c_p), axis=1)
    d_n = jnp.min(jnp.arccos(c_n), axis=1)
    div = d_p - d_n + margin
    hinge = jnp.maximum(div, 0.0)
    return jnp.mean(jnp.log1p(jnp.exp(hinge)))


if __name__ == "__main__":
    key = jax.random.PRNGKey(0)
    k1, k2, k3, k4, k5, k6 = jax.random.split(key, 6)

    # Small shapes consistent with the module: anc (B, D), poses (B, P, D),
    # neges (B, N, D).
    B, P, N, D = 4, 3, 5, 64
    anc = jax.random.normal(k1, (B, D), jnp.float32)
    poses = jax.random.normal(k2, (B, P, D), jnp.float32)
    neges = jax.random.normal(k3, (B, N, D), jnp.float32)

    loss = multi_arccosine_triplet_loss_soft_margin_hard(anc, poses, neges)
    jax.block_until_ready(loss)
    ref = ref_loss(anc, poses, neges)
    assert loss.shape == ()
    assert jnp.allclose(loss, ref, rtol=1e-4, atol=1e-4), (loss, ref)

    # Larger case: exercises batch padding (100 -> 128) and a 2-step grid.
    B2, P2, N2, D2 = 100, 3, 5, 128
    anc2 = jax.random.normal(k4, (B2, D2), jnp.float32)
    poses2 = jax.random.normal(k5, (B2, P2, D2), jnp.float32)
    neges2 = jax.random.normal(k6, (B2, N2, D2), jnp.float32)

    loss2 = multi_arccosine_triplet_loss_soft_margin_hard(anc2, poses2, neges2)
    jax.block_until_ready(loss2)
    ref2 = ref_loss(anc2, poses2, neges2)
    assert jnp.allclose(loss2, ref2, rtol=1e-4, atol=1e-4), (loss2, ref2)

    print("KERNEL_OK")
</pallas_src>

<mosaic_0001>
module attributes {stable_mosaic.version = 11 : i64} {
  func.func @_triplet_cos_kernel(%arg0: i32, %arg1: memref<8x64xf32, #tpu.memory_space<vmem>>, %arg2: memref<8x3x64xf32, #tpu.memory_space<vmem>>, %arg3: memref<8x5x64xf32, #tpu.memory_space<vmem>>, %arg4: memref<8x1xf32, #tpu.memory_space<vmem>>, %arg5: memref<8x1xf32, #tpu.memory_space<vmem>>) attributes {dimension_semantics = [#tpu.dimension_semantics<parallel>], iteration_bounds = array<i64: 1>, scalar_prefetch = 0 : i64, scratch_operands = 0 : i64, tpu.core_type = #tpu.core_type<tc>, window_params = [{transform_indices = @transform_0, window_bounds = array<i64: 8, 64>}, {transform_indices = @transform_1, window_bounds = array<i64: 8, 3, 64>}, {transform_indices = @transform_2, window_bounds = array<i64: 8, 5, 64>}, {transform_indices = @transform_3, window_bounds = array<i64: 8, 1>}, {transform_indices = @transform_4, window_bounds = array<i64: 8, 1>}]} {
    %c0 = arith.constant 0 : index
    %c0_0 = arith.constant 0 : index
    %0 = vector.load %arg1[%c0, %c0_0] : memref<8x64xf32, #tpu.memory_space<vmem>>, vector<8x64xf32>
    %1 = arith.mulf %0, %0 : vector<8x64xf32>
    %cst = arith.constant dense<0.000000e+00> : vector<8xf32>
    %2 = vector.multi_reduction <add>, %1, %cst [1] : vector<8x64xf32> to vector<8xf32>
    %3 = vector.shape_cast %2 : vector<8xf32> to vector<8x1xf32>
    %4 = math.sqrt %3 : vector<8x1xf32>
    %c0_1 = arith.constant 0 : index
    %c0_2 = arith.constant 0 : index
    %c0_3 = arith.constant 0 : index
    %5 = vector.load %arg2[%c0_1, %c0_2, %c0_3] : memref<8x3x64xf32, #tpu.memory_space<vmem>>, vector<8x3x64xf32>
    %6 = vector.shape_cast %0 : vector<8x64xf32> to vector<8x1x64xf32>
    %7 = vector.broadcast %6 : vector<8x1x64xf32> to vector<8x3x64xf32>
    %8 = arith.mulf %7, %5 : vector<8x3x64xf32>
    %cst_4 = arith.constant dense<0.000000e+00> : vector<8x3xf32>
    %9 = vector.multi_reduction <add>, %8, %cst_4 [2] : vector<8x3x64xf32> to vector<8x3xf32>
    %10 = arith.mulf %5, %5 : vector<8x3x64xf32>
    %cst_5 = arith.constant dense<0.000000e+00> : vector<8x3xf32>
    %11 = vector.multi_reduction <add>, %10, %cst_5 [2] : vector<8x3x64xf32> to vector<8x3xf32>
    %12 = math.sqrt %11 : vector<8x3xf32>
    %13 = vector.broadcast %4 : vector<8x1xf32> to vector<8x3xf32>
    %14 = arith.mulf %13, %12 : vector<8x3xf32>
    %cst_6 = arith.constant 9.99999993E-9 : f32
    %15 = vector.broadcast %cst_6 : f32 to vector<8x3xf32>
    %16 = arith.maximumf %14, %15 : vector<8x3xf32>
    %17 = arith.divf %9, %16 : vector<8x3xf32>
    %cst_7 = arith.constant -1.000000e+00 : f32
    %cst_8 = arith.constant 1.000000e+00 : f32
    %18 = vector.broadcast %cst_7 : f32 to vector<8x3xf32>
    %19 = arith.maximumf %18, %17 : vector<8x3xf32>
    %20 = vector.broadcast %cst_8 : f32 to vector<8x3xf32>
    %21 = arith.minimumf %20, %19 : vector<8x3xf32>
    %cst_9 = arith.constant dense<0x7F800000> : vector<8xf32>
    %22 = vector.multi_reduction <minimumf>, %21, %cst_9 [1] : vector<8x3xf32> to vector<8xf32>
    %23 = vector.shape_cast %22 : vector<8xf32> to vector<8x1xf32>
    %c0_10 = arith.constant 0 : index
    %c0_11 = arith.constant 0 : index
    %24 = vector.load %arg4[%c0_10, %c0_11] : memref<8x1xf32, #tpu.memory_space<vmem>>, vector<8x1xf32>
    tpu.vector_store %arg4[%c0_10, %c0_11], %23 {strides = array<i32>} : memref<8x1xf32, #tpu.memory_space<vmem>>, vector<8x1xf32>,
    %c0_12 = arith.constant 0 : index
    %c0_13 = arith.constant 0 : index
    %c0_14 = arith.constant 0 : index
    %25 = vector.load %arg3[%c0_12, %c0_13, %c0_14] : memref<8x5x64xf32, #tpu.memory_space<vmem>>, vector<8x5x64xf32>
    %26 = vector.shape_cast %0 : vector<8x64xf32> to vector<8x1x64xf32>
    %27 = vector.broadcast %26 : vector<8x1x64xf32> to vector<8x5x64xf32>
    %28 = arith.mulf %27, %25 : vector<8x5x64xf32>
    %cst_15 = arith.constant dense<0.000000e+00> : vector<8x5xf32>
    %29 = vector.multi_reduction <add>, %28, %cst_15 [2] : vector<8x5x64xf32> to vector<8x5xf32>
    %30 = arith.mulf %25, %25 : vector<8x5x64xf32>
    %cst_16 = arith.constant dense<0.000000e+00> : vector<8x5xf32>
    %31 = vector.multi_reduction <add>, %30, %cst_16 [2] : vector<8x5x64xf32> to vector<8x5xf32>
    %32 = math.sqrt %31 : vector<8x5xf32>
    %33 = vector.broadcast %4 : vector<8x1xf32> to vector<8x5xf32>
    %34 = arith.mulf %33, %32 : vector<8x5xf32>
    %cst_17 = arith.constant 9.99999993E-9 : f32
    %35 = vector.broadcast %cst_17 : f32 to vector<8x5xf32>
    %36 = arith.maximumf %34, %35 : vector<8x5xf32>
    %37 = arith.divf %29, %36 : vector<8x5xf32>
    %cst_18 = arith.constant -1.000000e+00 : f32
    %cst_19 = arith.constant 1.000000e+00 : f32
    %38 = vector.broadcast %cst_18 : f32 to vector<8x5xf32>
    %39 = arith.maximumf %38, %37 : vector<8x5xf32>
    %40 = vector.broadcast %cst_19 : f32 to vector<8x5xf32>
    %41 = arith.minimumf %40, %39 : vector<8x5xf32>
    %cst_20 = arith.constant dense<0xFF800000> : vector<8xf32>
    %42 = vector.multi_reduction <maximumf>, %41, %cst_20 [1] : vector<8x5xf32> to vector<8xf32>
    %43 = vector.shape_cast %42 : vector<8xf32> to vector<8x1xf32>
    %c0_21 = arith.constant 0 : index
    %c0_22 = arith.constant 0 : index
    %44 = vector.load %arg5[%c0_21, %c0_22] : memref<8x1xf32, #tpu.memory_space<vmem>>, vector<8x1xf32>
    tpu.vector_store %arg5[%c0_21, %c0_22], %43 {strides = array<i32>} : memref<8x1xf32, #tpu.memory_space<vmem>>, vector<8x1xf32>,
    return
  }
  func.func @transform_0(%arg0: i32) -> (i32, i32) {
    %c0_i32 = arith.constant 0 : i32
    %c0_i32_0 = arith.constant 0 : i32
    return %arg0, %c0_i32 : i32, i32
  }
  func.func @transform_1(%arg0: i32) -> (i32, i32, i32) {
    %c0_i32 = arith.constant 0 : i32
    %c0_i32_0 = arith.constant 0 : i32
    %c0_i32_1 = arith.constant 0 : i32
    return %arg0, %c0_i32, %c0_i32_0 : i32, i32, i32
  }
  func.func @transform_2(%arg0: i32) -> (i32, i32, i32) {
    %c0_i32 = arith.constant 0 : i32
    %c0_i32_0 = arith.constant 0 : i32
    %c0_i32_1 = arith.constant 0 : i32
    return %arg0, %c0_i32, %c0_i32_0 : i32, i32, i32
  }
  func.func @transform_3(%arg0: i32) -> (i32, i32) {
    %c0_i32 = arith.constant 0 : i32
    %c0_i32_0 = arith.constant 0 : i32
    return %arg0, %c0_i32 : i32, i32
  }
  func.func @transform_4(%arg0: i32) -> (i32, i32) {
    %c0_i32 = arith.constant 0 : i32
    %c0_i32_0 = arith.constant 0 : i32
    return %arg0, %c0_i32 : i32, i32
  }
}

</mosaic_0001>

<llo_original>
// kernel: multi_arccosine_triplet_loss_soft_margin_hard.1
$region0: #{multi_arccosine_triplet_loss_soft_margin_hard.1}
  #allocation0 [shape = 'u32[]', space=smem, size = 0x4, offset = 0x4, fixed_abs, tag = 'smem constant byte address 0x4 - core index']
  #allocation1 [shape = 'u32[72,128]{1,0:T(1,128)}', space=vmem, size = 0x9000, scoped, tag = 'internal scratch']
  %s0 = inlined_call_operand.vmem [shape: f32[8,64], index: 0, kind: input, shape index: {}]
  %s1 = inlined_call_operand.vmem [shape: f32[8,3,64], index: 1, kind: input, shape index: {}]
  %s2 = inlined_call_operand.vmem [shape: f32[8,5,64], index: 2, kind: input, shape index: {}]
  %s3 = inlined_call_operand.vmem [shape: f32[8,1], index: 3, kind: output, shape index: {0}]
  %s4 = inlined_call_operand.vmem [shape: f32[8,1], index: 4, kind: output, shape index: {1}]
  %5 = xla_tuple %s3, %s4
  %s6 = sld [smem:[#allocation0]]
  $region30: #{multi_arccosine_triplet_loss_soft_margin_hard.1} parent=0
    _
  %s8 = ssub.s32 1, %s6
  %s9 = scalar_select 0, %s8, %s6
  // Predicated region
  $region2: #{multi_arccosine_triplet_loss_soft_margin_hard.1} parent=0 // pred_check
    _
  $region3: #{multi_arccosine_triplet_loss_soft_margin_hard.1} parent=0 // pred_check_branch
    %11 = sbr.rel (0) target = $region5
  $region4: #{multi_arccosine_triplet_loss_soft_margin_hard.1} parent=0 // pred_region
    _
  $region5: #{multi_arccosine_triplet_loss_soft_margin_hard.1} parent=0 // pred_fallthru
    _
  // Predicated region
  $region6: #{multi_arccosine_triplet_loss_soft_margin_hard.1} parent=0 // pred_check
    _
  $region7: #{multi_arccosine_triplet_loss_soft_margin_hard.1} parent=0 // pred_check_branch
    %13 = sbr.rel (0) target = $region9
  $region8: #{multi_arccosine_triplet_loss_soft_margin_hard.1} parent=0 // pred_region
    _
  $region9: #{multi_arccosine_triplet_loss_soft_margin_hard.1} parent=0 // pred_fallthru
    _
  // Predicated region
  $region10: #{multi_arccosine_triplet_loss_soft_margin_hard.1} parent=0 // pred_check
    _
  $region11: #{multi_arccosine_triplet_loss_soft_margin_hard.1} parent=0 // pred_check_branch
    %15 = sbr.rel (0) target = $region13
  $region12: #{multi_arccosine_triplet_loss_soft_margin_hard.1} parent=0 // pred_region
    _
  $region13: #{multi_arccosine_triplet_loss_soft_margin_hard.1} parent=0 // pred_fallthru
    _
  %v16 = vld [vmem:[%s0] sm:$0xff]
  %v17 = vmul.f32 %v16, %v16
  %vm18 = vcmask 523264
  %v19 = vsel %vm18, %v17, 0.0
  %20 = vadd.xlane.f32.xlu0 %v19
  %v21 = vpop.xlane.xlu0 %20
  %v22 = vrsqrt.pop %v21
  %v23 = vmul.f32 %v22, %v21
  %v24 = vmul.f32 %v23, %v22
  %v25 = vmul.f32 0.5, %v24
  %v26 = vsub.f32 1.5, %v25
  %v27 = vmul.f32 %v22, %v26
  %v28 = vmul.f32 %v21, %v27
  %vm29 = vcmp.eq.f32.partialorder %v21, inf
  %v30 = vsel %vm29, %v21, %v28
  %vm31 = vcmp.eq.f32.partialorder %v21, 0.0
  %v32 = vand.u32 %v21, 2147483648
  %v33 = vsel %vm31, %v32, %v30
  %v34 = vld [vmem:[%s1] sm:$0x7]
  %v35 = vld [vmem:[%s1 + $0x4] sm:$0x7]
  %v36 = vld [vmem:[%s1 + $0x8] sm:$0x7]
  %v37 = vld [vmem:[%s1 + $0xc] sm:$0x7]
  %v38 = vld [vmem:[%s1 + $0x10] sm:$0x7]
  %v39 = vld [vmem:[%s1 + $0x14] sm:$0x7]
  %v40 = vld [vmem:[%s1 + $0x18] sm:$0x7]
  %v41 = vld [vmem:[%s1 + $0x1c] sm:$0x7]
  %v43 = vrot.slane %v16, 1
  %v44 = vrot.slane %v16, 2
  %v45 = vrot.slane %v16, 3
  %v46 = vrot.slane %v16, 4
  %v47 = vrot.slane %v16, 5
  %v48 = vrot.slane %v16, 6
  %v49 = vrot.slane %v16, 7
  %v50 = vperm.slane %v16, 0
  %v51 = vperm.slane %v43, 0
  %v52 = vperm.slane %v44, 0
  %v53 = vperm.slane %v45, 0
  %v54 = vperm.slane %v46, 0
  %v55 = vperm.slane %v47, 0
  %v56 = vperm.slane %v48, 0
  %v57 = vperm.slane %v49, 0
  %v66 = vmul.f32 %v50, %v34
  %v67 = vmul.f32 %v51, %v35
  %v68 = vmul.f32 %v52, %v36
  %v69 = vmul.f32 %v53, %v37
  %v70 = vmul.f32 %v54, %v38
  %v71 = vmul.f32 %v55, %v39
  %v72 = vmul.f32 %v56, %v40
  %v73 = vmul.f32 %v57, %v41
  %vm74 = vcmask 518144
  %v75 = vsel %vm74, %v66, 0.0
  %76 = vadd.xlane.f32.xlu0 %v75
  %v77 = vpop.xlane.xlu0 %76
  %v78 = vsel %vm74, %v67, 0.0
  %79 = vadd.xlane.f32.xlu0 %v78
  %v80 = vpop.xlane.xlu0 %79
  %v81 = vsel %vm74, %v68, 0.0
  %82 = vadd.xlane.f32.xlu0 %v81
  %v83 = vpop.xlane.xlu0 %82
  %v84 = vsel %vm74, %v69, 0.0
  %85 = vadd.xlane.f32.xlu0 %v84
  %v86 = vpop.xlane.xlu0 %85
  %v87 = vsel %vm74, %v70, 0.0
  %88 = vadd.xlane.f32.xlu0 %v87
  %v89 = vpop.xlane.xlu0 %88
  %v90 = vsel %vm74, %v71, 0.0
  %91 = vadd.xlane.f32.xlu0 %v90
  %v92 = vpop.xlane.xlu0 %91
  %v93 = vsel %vm74, %v72, 0.0
  %94 = vadd.xlane.f32.xlu0 %v93
  %v95 = vpop.xlane.xlu0 %94
  %v96 = vsel %vm74, %v73, 0.0
  %97 = vadd.xlane.f32.xlu0 %v96
  %v98 = vpop.xlane.xlu0 %97
  %v99 = vmul.f32 %v34, %v34
  %v100 = vmul.f32 %v35, %v35
  %v101 = vmul.f32 %v36, %v36
  %v102 = vmul.f32 %v37, %v37
  %v103 = vmul.f32 %v38, %v38
  %v104 = vmul.f32 %v39, %v39
  %v105 = vmul.f32 %v40, %v40
  %v106 = vmul.f32 %v41, %v41
  %v107 = vsel %vm74, %v99, 0.0
  %108 = vadd.xlane.f32.xlu0 %v107
  %v109 = vpop.xlane.xlu0 %108
  %v110 = vsel %vm74, %v100, 0.0
  %111 = vadd.xlane.f32.xlu0 %v110
  %v112 = vpop.xlane.xlu0 %111
  %v113 = vsel %vm74, %v101, 0.0
  %114 = vadd.xlane.f32.xlu0 %v113
  %v115 = vpop.xlane.xlu0 %114
  %v116 = vsel %vm74, %v102, 0.0
  %117 = vadd.xlane.f32.xlu0 %v116
  %v118 = vpop.xlane.xlu0 %117
  %v119 = vsel %vm74, %v103, 0.0
  %120 = vadd.xlane.f32.xlu0 %v119
  %v121 = vpop.xlane.xlu0 %120
  %v122 = vsel %vm74, %v104, 0.0
  %123 = vadd.xlane.f32.xlu0 %v122
  %v124 = vpop.xlane.xlu0 %123
  %v125 = vsel %vm74, %v105, 0.0
  %126 = vadd.xlane.f32.xlu0 %v125
  %v127 = vpop.xlane.xlu0 %126
  %v128 = vsel %vm74, %v106, 0.0
  %129 = vadd.xlane.f32.xlu0 %v128
  %v130 = vpop.xlane.xlu0 %129
  %v131 = vrsqrt.pop %v109
  %v132 = vmul.f32 %v131, %v109
  %v133 = vmul.f32 %v132, %v131
  %v134 = vmul.f32 0.5, %v133
  %v135 = vsub.f32 1.5, %v134
  %v136 = vmul.f32 %v131, %v135
  %v137 = vmul.f32 %v109, %v136
  %vm138 = vcmp.eq.f32.partialorder %v109, inf
  %v139 = vsel %vm138, %v109, %v137
  %vm140 = vcmp.eq.f32.partialorder %v109, 0.0
  %v141 = vand.u32 %v109, 2147483648
  %v142 = vsel %vm140, %v141, %v139
  %v143 = vrsqrt.pop %v112
  %v144 = vmul.f32 %v143, %v112
  %v145 = vmul.f32 %v144, %v143
  %v146 = vmul.f32 0.5, %v145
  %v147 = vsub.f32 1.5, %v146
  %v148 = vmul.f32 %v143, %v147
  %v149 = vmul.f32 %v112, %v148
  %vm150 = vcmp.eq.f32.partialorder %v112, inf
  %v151 = vsel %vm150, %v112, %v149
  %vm152 = vcmp.eq.f32.partialorder %v112, 0.0
  %v153 = vand.u32 %v112, 2147483648
  %v154 = vsel %vm152, %v153, %v151
  %v155 = vrsqrt.pop %v115
  %v156 = vmul.f32 %v155, %v115
  %v157 = vmul.f32 %v156, %v155
  %v158 = vmul.f32 0.5, %v157
  %v159 = vsub.f32 1.5, %v158
  %v160 = vmul.f32 %v155, %v159
  %v161 = vmul.f32 %v115, %v160
  %vm162 = vcmp.eq.f32.partialorder %v115, inf
  %v163 = vsel %vm162, %v115, %v161
  %vm164 = vcmp.eq.f32.partialorder %v115, 0.0
  %v165 = vand.u32 %v115, 2147483648
  %v166 = vsel %vm164, %v165, %v163
  %v167 = vrsqrt.pop %v118
  %v168 = vmul.f32 %v167, %v118
  %v169 = vmul.f32 %v168, %v167
  %v170 = vmul.f32 0.5, %v169
  %v171 = vsub.f32 1.5, %v170
  %v172 = vmul.f32 %v167, %v171
  %v173 = vmul.f32 %v118, %v172
  %vm174 = vcmp.eq.f32.partialorder %v118, inf
  %v175 = vsel %vm174, %v118, %v173
  %vm176 = vcmp.eq.f32.partialorder %v118, 0.0
  %v177 = vand.u32 %v118, 2147483648
  %v178 = vsel %vm176, %v177, %v175
  %v179 = vrsqrt.pop %v121
  %v180 = vmul.f32 %v179, %v121
  %v181 = vmul.f32 %v180, %v179
  %v182 = vmul.f32 0.5, %v181
  %v183 = vsub.f32 1.5, %v182
  %v184 = vmul.f32 %v179, %v183
  %v185 = vmul.f32 %v121, %v184
  %vm186 = vcmp.eq.f32.partialorder %v121, inf
  %v187 = vsel %vm186, %v121, %v185
  %vm188 = vcmp.eq.f32.partialorder %v121, 0.0
  %v189 = vand.u32 %v121, 2147483648
  %v190 = vsel %vm188, %v189, %v187
  %v191 = vrsqrt.pop %v124
  %v192 = vmul.f32 %v191, %v124
  %v193 = vmul.f32 %v192, %v191
  %v194 = vmul.f32 0.5, %v193
  %v195 = vsub.f32 1.5, %v194
  %v196 = vmul.f32 %v191, %v195
  %v197 = vmul.f32 %v124, %v196
  %vm198 = vcmp.eq.f32.partialorder %v124, inf
  %v199 = vsel %vm198, %v124, %v197
  %vm200 = vcmp.eq.f32.partialorder %v124, 0.0
  %v201 = vand.u32 %v124, 2147483648
  %v202 = vsel %vm200, %v201, %v199
  %v203 = vrsqrt.pop %v127
  %v204 = vmul.f32 %v203, %v127
  %v205 = vmul.f32 %v204, %v203
  %v206 = vmul.f32 0.5, %v205
  %v207 = vsub.f32 1.5, %v206
  %v208 = vmul.f32 %v203, %v207
  %v209 = vmul.f32 %v127, %v208
  %vm210 = vcmp.eq.f32.partialorder %v127, inf
  %v211 = vsel %vm210, %v127, %v209
  %vm212 = vcmp.eq.f32.partialorder %v127, 0.0
  %v213 = vand.u32 %v127, 2147483648
  %v214 = vsel %vm212, %v213, %v211
  %v215 = vrsqrt.pop %v130
  %v216 = vmul.f32 %v215, %v130
  %v217 = vmul.f32 %v216, %v215
  %v218 = vmul.f32 0.5, %v217
  %v219 = vsub.f32 1.5, %v218
  %v220 = vmul.f32 %v215, %v219
  %v221 = vmul.f32 %v130, %v220
  %vm222 = vcmp.eq.f32.partialorder %v130, inf
  %v223 = vsel %vm222, %v130, %v221
  %vm224 = vcmp.eq.f32.partialorder %v130, 0.0
  %v225 = vand.u32 %v130, 2147483648
  %v226 = vsel %vm224, %v225, %v223
  %v235 = vlaneseq
  %v236 = vand.u32 %v235, 127
  %v237 = vperm.slane %v142, %v236
  %v238 = vperm.slane %v154, %v236
  %v239 = vperm.slane %v166, %v236
  %v240 = vperm.slane %v178, %v236
  %v241 = vperm.slane %v190, %v236
  %v242 = vperm.slane %v202, %v236
  %v243 = vperm.slane %v214, %v236
  %v244 = vperm.slane %v226, %v236
  %vm245 = vcmask 1041409
  %v246 = vsel %vm245, %v238, %v237
  %vm247 = vcmask 1042434
  %v248 = vsel %vm247, %v239, %v246
  %vm249 = vcmask 1043459
  %v250 = vsel %vm249, %v240, %v248
  %vm251 = vcmask 1044484
  %v252 = vsel %vm251, %v241, %v250
  %vm253 = vcmask 1045509
  %v254 = vsel %vm253, %v242, %v252
  %vm255 = vcmask 1046534
  %v256 = vsel %vm255, %v243, %v254
  %vm257 = vcmask 1047559
  %v258 = vsel %vm257, %v244, %v256
  %v260 = vmul.f32 %v33, %v258
  %v261 = vmax.f32 %v260, 1e-08
  %v263 = vperm.slane %v261, 0
  %v264 = vlaneseq
  %v265 = vshrl.u32 %v264, 7
  %267 = vset.pattern.permute.xlu0 %v265
  %268 = vperm.xlu0 %267, %v263
  %v269 = vpop.permute.xlu0 %268
  %v270 = vperm.slane %v261, 1
  %v271 = vlaneseq
  %v272 = vshrl.u32 %v271, 7
  %274 = vset.pattern.permute.xlu0 %v272
  %275 = vperm.xlu0 %274, %v270
  %v276 = vpop.permute.xlu0 %275
  %v277 = vperm.slane %v261, 2
  %v278 = vlaneseq
  %v279 = vshrl.u32 %v278, 7
  %281 = vset.pattern.permute.xlu0 %v279
  %282 = vperm.xlu0 %281, %v277
  %v283 = vpop.permute.xlu0 %282
  %v284 = vperm.slane %v261, 3
  %v285 = vlaneseq
  %v286 = vshrl.u32 %v285, 7
  %288 = vset.pattern.permute.xlu0 %v286
  %289 = vperm.xlu0 %288, %v284
  %v290 = vpop.permute.xlu0 %289
  %v291 = vperm.slane %v261, 4
  %v292 = vlaneseq
  %v293 = vshrl.u32 %v292, 7
  %295 = vset.pattern.permute.xlu0 %v293
  %296 = vperm.xlu0 %295, %v291
  %v297 = vpop.permute.xlu0 %296
  %v298 = vperm.slane %v261, 5
  %v299 = vlaneseq
  %v300 = vshrl.u32 %v299, 7
  %302 = vset.pattern.permute.xlu0 %v300
  %303 = vperm.xlu0 %302, %v298
  %v304 = vpop.permute.xlu0 %303
  %v305 = vperm.slane %v261, 6
  %v306 = vlaneseq
  %v307 = vshrl.u32 %v306, 7
  %309 = vset.pattern.permute.xlu0 %v307
  %310 = vperm.xlu0 %309, %v305
  %v311 = vpop.permute.xlu0 %310
  %v312 = vperm.slane %v261, 7
  %v313 = vlaneseq
  %v314 = vshrl.u32 %v313, 7
  %316 = vset.pattern.permute.xlu0 %v314
  %317 = vperm.xlu0 %316, %v312
  %v318 = vpop.permute.xlu0 %317
  %v327 = vrcp.pop %v269
  %v328 = vmul.f32 %v269, %v327
  %v329 = vsub.f32 1.0, %v328
  %v330 = vmul.f32 %v327, %v329
  %v331 = vadd.f32 %v327, %v330
  %vm332 = vweird.f32 %v269
  %vm333 = vweird.f32 %v327
  %vm334 = vmor %vm332, %vm333
  %v335 = vsel %vm334, %v327, %v331
  %v336 = vand.u32 2147483647, %v269
  %vm337 = vcmp.eq.f32.partialorder %v336, 8.507059e+37
  %v338 = vand.u32 %v269, 2147483648
  %v339 = vor.u32 1.1754944e-38, %v338
  %v340 = vsel %vm337, %v339, %v335
  %v341 = vmul.f32 %v77, %v340
  %v342 = vrcp.pop %v276
  %v343 = vmul.f32 %v276, %v342
  %v344 = vsub.f32 1.0, %v343
  %v345 = vmul.f32 %v342, %v344
  %v346 = vadd.f32 %v342, %v345
  %vm347 = vweird.f32 %v276
  %vm348 = vweird.f32 %v342
  %vm349 = vmor %vm347, %vm348
  %v350 = vsel %vm349, %v342, %v346
  %v351 = vand.u32 2147483647, %v276
  %vm352 = vcmp.eq.f32.partialorder %v351, 8.507059e+37
  %v353 = vand.u32 %v276, 2147483648
  %v354 = vor.u32 1.1754944e-38, %v353
  %v355 = vsel %vm352, %v354, %v350
  %v356 = vmul.f32 %v80, %v355
  %v357 = vrcp.pop %v283
  %v358 = vmul.f32 %v283, %v357
  %v359 = vsub.f32 1.0, %v358
  %v360 = vmul.f32 %v357, %v359
  %v361 = vadd.f32 %v357, %v360
  %vm362 = vweird.f32 %v283
  %vm363 = vweird.f32 %v357
  %vm364 = vmor %vm362, %vm363
  %v365 = vsel %vm364, %v357, %v361
  %v366 = vand.u32 2147483647, %v283
  %vm367 = vcmp.eq.f32.partialorder %v366, 8.507059e+37
  %v368 = vand.u32 %v283, 2147483648
  %v369 = vor.u32 1.1754944e-38, %v368
  %v370 = vsel %vm367, %v369, %v365
  %v371 = vmul.f32 %v83, %v370
  %v372 = vrcp.pop %v290
  %v373 = vmul.f32 %v290, %v372
  %v374 = vsub.f32 1.0, %v373
  %v375 = vmul.f32 %v372, %v374
  %v376 = vadd.f32 %v372, %v375
  %vm377 = vweird.f32 %v290
  %vm378 = vweird.f32 %v372
  %vm379 = vmor %vm377, %vm378
  %v380 = vsel %vm379, %v372, %v376
  %v381 = vand.u32 2147483647, %v290
  %vm382 = vcmp.eq.f32.partialorder %v381, 8.507059e+37
  %v383 = vand.u32 %v290, 2147483648
  %v384 = vor.u32 1.1754944e-38, %v383
  %v385 = vsel %vm382, %v384, %v380
  %v386 = vmul.f32 %v86, %v385
  %v387 = vrcp.pop %v297
  %v388 = vmul.f32 %v297, %v387
  %v389 = vsub.f32 1.0, %v388
  %v390 = vmul.f32 %v387, %v389
  %v391 = vadd.f32 %v387, %v390
  %vm392 = vweird.f32 %v297
  %vm393 = vweird.f32 %v387
  %vm394 = vmor %vm392, %vm393
  %v395 = vsel %vm394, %v387, %v391
  %v396 = vand.u32 2147483647, %v297
  %vm397 = vcmp.eq.f32.partialorder %v396, 8.507059e+37
  %v398 = vand.u32 %v297, 2147483648
  %v399 = vor.u32 1.1754944e-38, %v398
  %v400 = vsel %vm397, %v399, %v395
  %v401 = vmul.f32 %v89, %v400
  %v402 = vrcp.pop %v304
  %v403 = vmul.f32 %v304, %v402
  %v404 = vsub.f32 1.0, %v403
  %v405 = vmul.f32 %v402, %v404
  %v406 = vadd.f32 %v402, %v405
  %vm407 = vweird.f32 %v304
  %vm408 = vweird.f32 %v402
  %vm409 = vmor %vm407, %vm408
  %v410 = vsel %vm409, %v402, %v406
  %v411 = vand.u32 2147483647, %v304
  %vm412 = vcmp.eq.f32.partialorder %v411, 8.507059e+37
  %v413 = vand.u32 %v304, 2147483648
  %v414 = vor.u32 1.1754944e-38, %v413
  %v415 = vsel %vm412, %v414, %v410
  %v416 = vmul.f32 %v92, %v415
  %v417 = vrcp.pop %v311
  %v418 = vmul.f32 %v311, %v417
  %v419 = vsub.f32 1.0, %v418
  %v420 = vmul.f32 %v417, %v419
  %v421 = vadd.f32 %v417, %v420
  %vm422 = vweird.f32 %v311
  %vm423 = vweird.f32 %v417
  %vm424 = vmor %vm422, %vm423
  %v425 = vsel %vm424, %v417, %v421
  %v426 = vand.u32 2147483647, %v311
  %vm427 = vcmp.eq.f32.partialorder %v426, 8.507059e+37
  %v428 = vand.u32 %v311, 2147483648
  %v429 = vor.u32 1.1754944e-38, %v428
  %v430 = vsel %vm427, %v429, %v425
  %v431 = vmul.f32 %v95, %v430
  %v432 = vrcp.pop %v318
  %v433 = vmul.f32 %v318, %v432
  %v434 = vsub.f32 1.0, %v433
  %v435 = vmul.f32 %v432, %v434
  %v436 = vadd.f32 %v432, %v435
  %vm437 = vweird.f32 %v318
  %vm438 = vweird.f32 %v432
  %vm439 = vmor %vm437, %vm438
  %v440 = vsel %vm439, %v432, %v436
  %v441 = vand.u32 2147483647, %v318
  %vm442 = vcmp.eq.f32.partialorder %v441, 8.507059e+37
  %v443 = vand.u32 %v318, 2147483648
  %v444 = vor.u32 1.1754944e-38, %v443
  %v445 = vsel %vm442, %v444, %v440
  %v446 = vmul.f32 %v98, %v445
  %v447 = vmax.f32 %v341, -1.0
  %v448 = vmax.f32 %v356, -1.0
  %v449 = vmax.f32 %v371, -1.0
  %v450 = vmax.f32 %v386, -1.0
  %v451 = vmax.f32 %v401, -1.0
  %v452 = vmax.f32 %v416, -1.0
  %v453 = vmax.f32 %v431, -1.0
  %v454 = vmax.f32 %v446, -1.0
  %v455 = vmin.f32 %v447, 1.0
  %v456 = vmin.f32 %v448, 1.0
  %v457 = vmin.f32 %v449, 1.0
  %v458 = vmin.f32 %v450, 1.0
  %v459 = vmin.f32 %v451, 1.0
  %v460 = vmin.f32 %v452, 1.0
  %v461 = vmin.f32 %v453, 1.0
  %v462 = vmin.f32 %v454, 1.0
  %471 = vset.pattern.permute.xlu0 0
  %472 = vperm.xlu0 %471, %v455
  %v473 = vpop.permute.xlu0 %472
  %474 = vset.pattern.permute.xlu0 0
  %475 = vperm.xlu0 %474, %v456
  %v476 = vpop.permute.xlu0 %475
  %477 = vset.pattern.permute.xlu0 0
  %478 = vperm.xlu0 %477, %v457
  %v479 = vpop.permute.xlu0 %478
  %480 = vset.pattern.permute.xlu0 0
  %481 = vperm.xlu0 %480, %v458
  %v482 = vpop.permute.xlu0 %481
  %483 = vset.pattern.permute.xlu0 0
  %484 = vperm.xlu0 %483, %v459
  %v485 = vpop.permute.xlu0 %484
  %486 = vset.pattern.permute.xlu0 0
  %487 = vperm.xlu0 %486, %v460
  %v488 = vpop.permute.xlu0 %487
  %489 = vset.pattern.permute.xlu0 0
  %490 = vperm.xlu0 %489, %v461
  %v491 = vpop.permute.xlu0 %490
  %492 = vset.pattern.permute.xlu0 0
  %493 = vperm.xlu0 %492, %v462
  %v494 = vpop.permute.xlu0 %493
  %v495 = vperm.slane %v473, %v236
  %v496 = vperm.slane %v476, %v236
  %v497 = vperm.slane %v479, %v236
  %v498 = vperm.slane %v482, %v236
  %v499 = vperm.slane %v485, %v236
  %v500 = vperm.slane %v488, %v236
  %v501 = vperm.slane %v491, %v236
  %v502 = vperm.slane %v494, %v236
  %v503 = vsel %vm245, %v496, %v495
  %v504 = vsel %vm247, %v497, %v503
  %v505 = vsel %vm249, %v498, %v504
  %v506 = vsel %vm251, %v499, %v505
  %v507 = vsel %vm253, %v500, %v506
  %v508 = vsel %vm255, %v501, %v507
  %v509 = vsel %vm257, %v502, %v508
  %vm511 = vcmask 23552
  %v512 = vsel %vm511, %v509, inf
  %513 = vmin.xlane.f32.xlu0 %v512
  %v514 = vpop.xlane.xlu0 %513
  %vm515 = vcmask 7168
  %516 = vst.msk [vmem:[%s3] sm:$0xff] %vm515, %v514
  %v517 = vld [vmem:[%s2] sm:$0x1f]
  %v518 = vld [vmem:[%s2 + $0x8] sm:$0x1f]
  %v519 = vld [vmem:[%s2 + $0x10] sm:$0x1f]
  %v520 = vld [vmem:[%s2 + $0x18] sm:$0x1f]
  %v521 = vld [vmem:[%s2 + $0x20] sm:$0x1f]
  %v522 = vld [vmem:[%s2 + $0x28] sm:$0x1f]
  %v523 = vld [vmem:[%s2 + $0x30] sm:$0x1f]
  %v524 = vld [vmem:[%s2 + $0x38] sm:$0x1f]
  %v525 = vmul.f32 %v50, %v517
  %v526 = vmul.f32 %v51, %v518
  %v527 = vmul.f32 %v52, %v519
  %v528 = vmul.f32 %v53, %v520
  %v529 = vmul.f32 %v54, %v521
  %v530 = vmul.f32 %v55, %v522
  %v531 = vmul.f32 %v56, %v523
  %v532 = vmul.f32 %v57, %v524
  %vm533 = vcmask 520192
  %v534 = vsel %vm533, %v525, 0.0
  %535 = vadd.xlane.f32.xlu0 %v534
  %v536 = vpop.xlane.xlu0 %535
  %v537 = vsel %vm533, %v526, 0.0
  %538 = vadd.xlane.f32.xlu0 %v537
  %v539 = vpop.xlane.xlu0 %538
  %v540 = vsel %vm533, %v527, 0.0
  %541 = vadd.xlane.f32.xlu0 %v540
  %v542 = vpop.xlane.xlu0 %541
  %v543 = vsel %vm533, %v528, 0.0
  %544 = vadd.xlane.f32.xlu0 %v543
  %v545 = vpop.xlane.xlu0 %544
  %v546 = vsel %vm533, %v529, 0.0
  %547 = vadd.xlane.f32.xlu0 %v546
  %v548 = vpop.xlane.xlu0 %547
  %v549 = vsel %vm533, %v530, 0.0
  %550 = vadd.xlane.f32.xlu0 %v549
  %v551 = vpop.xlane.xlu0 %550
  %v552 = vsel %vm533, %v531, 0.0
  %553 = vadd.xlane.f32.xlu0 %v552
  %v554 = vpop.xlane.xlu0 %553
  %v555 = vsel %vm533, %v532, 0.0
  %556 = vadd.xlane.f32.xlu0 %v555
  %v557 = vpop.xlane.xlu0 %556
  %v558 = vmul.f32 %v517, %v517
  %v559 = vmul.f32 %v518, %v518
  %v560 = vmul.f32 %v519, %v519
  %v561 = vmul.f32 %v520, %v520
  %v562 = vmul.f32 %v521, %v521
  %v563 = vmul.f32 %v522, %v522
  %v564 = vmul.f32 %v523, %v523
  %v565 = vmul.f32 %v524, %v524
  %v566 = vsel %vm533, %v558, 0.0
  %567 = vadd.xlane.f32.xlu0 %v566
  %v568 = vpop.xlane.xlu0 %567
  %v569 = vsel %vm533, %v559, 0.0
  %570 = vadd.xlane.f32.xlu0 %v569
  %v571 = vpop.xlane.xlu0 %570
  %v572 = vsel %vm533, %v560, 0.0
  %573 = vadd.xlane.f32.xlu0 %v572
  %v574 = vpop.xlane.xlu0 %573
  %v575 = vsel %vm533, %v561, 0.0
  %576 = vadd.xlane.f32.xlu0 %v575
  %v577 = vpop.xlane.xlu0 %576
  %v578 = vsel %vm533, %v562, 0.0
  %579 = vadd.xlane.f32.xlu0 %v578
  %v580 = vpop.xlane.xlu0 %579
  %v581 = vsel %vm533, %v563, 0.0
  %582 = vadd.xlane.f32.xlu0 %v581
  %v583 = vpop.xlane.xlu0 %582
  %v584 = vsel %vm533, %v564, 0.0
  %585 = vadd.xlane.f32.xlu0 %v584
  %v586 = vpop.xlane.xlu0 %585
  %v587 = vsel %vm533, %v565, 0.0
  %588 = vadd.xlane.f32.xlu0 %v587
  %v589 = vpop.xlane.xlu0 %588
  %v590 = vrsqrt.pop %v568
  %v591 = vmul.f32 %v590, %v568
  %v592 = vmul.f32 %v591, %v590
  %v593 = vmul.f32 0.5, %v592
  %v594 = vsub.f32 1.5, %v593
  %v595 = vmul.f32 %v590, %v594
  %v596 = vmul.f32 %v568, %v595
  %vm597 = vcmp.eq.f32.partialorder %v568, inf
  %v598 = vsel %vm597, %v568, %v596
  %vm599 = vcmp.eq.f32.partialorder %v568, 0.0
  %v600 = vand.u32 %v568, 2147483648
  %v601 = vsel %vm599, %v600, %v598
  %v602 = vrsqrt.pop %v571
  %v603 = vmul.f32 %v602, %v571
  %v604 = vmul.f32 %v603, %v602
  %v605 = vmul.f32 0.5, %v604
  %v606 = vsub.f32 1.5, %v605
  %v607 = vmul.f32 %v602, %v606
  %v608 = vmul.f32 %v571, %v607
  %vm609 = vcmp.eq.f32.partialorder %v571, inf
  %v610 = vsel %vm609, %v571, %v608
  %vm611 = vcmp.eq.f32.partialorder %v571, 0.0
  %v612 = vand.u32 %v571, 2147483648
  %v613 = vsel %vm611, %v612, %v610
  %v614 = vrsqrt.pop %v574
  %v615 = vmul.f32 %v614, %v574
  %v616 = vmul.f32 %v615, %v614
  %v617 = vmul.f32 0.5, %v616
  %v618 = vsub.f32 1.5, %v617
  %v619 = vmul.f32 %v614, %v618
  %v620 = vmul.f32 %v574, %v619
  %vm621 = vcmp.eq.f32.partialorder %v574, inf
  %v622 = vsel %vm621, %v574, %v620
  %vm623 = vcmp.eq.f32.partialorder %v574, 0.0
  %v624 = vand.u32 %v574, 2147483648
  %v625 = vsel %vm623, %v624, %v622
  %v626 = vrsqrt.pop %v577
  %v627 = vmul.f32 %v626, %v577
  %v628 = vmul.f32 %v627, %v626
  %v629 = vmul.f32 0.5, %v628
  %v630 = vsub.f32 1.5, %v629
  %v631 = vmul.f32 %v626, %v630
  %v632 = vmul.f32 %v577, %v631
  %vm633 = vcmp.eq.f32.partialorder %v577, inf
  %v634 = vsel %vm633, %v577, %v632
  %vm635 = vcmp.eq.f32.partialorder %v577, 0.0
  %v636 = vand.u32 %v577, 2147483648
  %v637 = vsel %vm635, %v636, %v634
  %v638 = vrsqrt.pop %v580
  %v639 = vmul.f32 %v638, %v580
  %v640 = vmul.f32 %v639, %v638
  %v641 = vmul.f32 0.5, %v640
  %v642 = vsub.f32 1.5, %v641
  %v643 = vmul.f32 %v638, %v642
  %v644 = vmul.f32 %v580, %v643
  %vm645 = vcmp.eq.f32.partialorder %v580, inf
  %v646 = vsel %vm645, %v580, %v644
  %vm647 = vcmp.eq.f32.partialorder %v580, 0.0
  %v648 = vand.u32 %v580, 2147483648
  %v649 = vsel %vm647, %v648, %v646
  %v650 = vrsqrt.pop %v583
  %v651 = vmul.f32 %v650, %v583
  %v652 = vmul.f32 %v651, %v650
  %v653 = vmul.f32 0.5, %v652
  %v654 = vsub.f32 1.5, %v653
  %v655 = vmul.f32 %v650, %v654
  %v656 = vmul.f32 %v583, %v655
  %vm657 = vcmp.eq.f32.partialorder %v583, inf
  %v658 = vsel %vm657, %v583, %v656
  %vm659 = vcmp.eq.f32.partialorder %v583, 0.0
  %v660 = vand.u32 %v583, 2147483648
  %v661 = vsel %vm659, %v660, %v658
  %v662 = vrsqrt.pop %v586
  %v663 = vmul.f32 %v662, %v586
  %v664 = vmul.f32 %v663, %v662
  %v665 = vmul.f32 0.5, %v664
  %v666 = vsub.f32 1.5, %v665
  %v667 = vmul.f32 %v662, %v666
  %v668 = vmul.f32 %v586, %v667
  %vm669 = vcmp.eq.f32.partialorder %v586, inf
  %v670 = vsel %vm669, %v586, %v668
  %vm671 = vcmp.eq.f32.partialorder %v586, 0.0
  %v672 = vand.u32 %v586, 2147483648
  %v673 = vsel %vm671, %v672, %v670
  %v674 = vrsqrt.pop %v589
  %v675 = vmul.f32 %v674, %v589
  %v676 = vmul.f32 %v675, %v674
  %v677 = vmul.f32 0.5, %v676
  %v678 = vsub.f32 1.5, %v677
  %v679 = vmul.f32 %v674, %v678
  %v680 = vmul.f32 %v589, %v679
  %vm681 = vcmp.eq.f32.partialorder %v589, inf
  %v682 = vsel %vm681, %v589, %v680
  %vm683 = vcmp.eq.f32.partialorder %v589, 0.0
  %v684 = vand.u32 %v589, 2147483648
  %v685 = vsel %vm683, %v684, %v682
  %v694 = vperm.slane %v601, %v236
  %v695 = vperm.slane %v613, %v236
  %v696 = vperm.slane %v625, %v236
  %v697 = vperm.slane %v637, %v236
  %v698 = vperm.slane %v649, %v236
  %v699 = vperm.slane %v661, %v236
  %v700 = vperm.slane %v673, %v236
  %v701 = vperm.slane %v685, %v236
  %v702 = vsel %vm245, %v695, %v694
  %v703 = vsel %vm247, %v696, %v702
  %v704 = vsel %vm249, %v697, %v703
  %v705 = vsel %vm251, %v698, %v704
  %v706 = vsel %vm253, %v699, %v705
  %v707 = vsel %vm255, %v700, %v706
  %v708 = vsel %vm257, %v701, %v707
  %v710 = vmul.f32 %v33, %v708
  %v711 = vmax.f32 %v710, 1e-08
  %v713 = vperm.slane %v711, 0
  %v714 = vlaneseq
  %v715 = vshrl.u32 %v714, 7
  %717 = vset.pattern.permute.xlu0 %v715
  %718 = vperm.xlu0 %717, %v713
  %v719 = vpop.permute.xlu0 %718
  %v720 = vperm.slane %v711, 1
  %v721 = vlaneseq
  %v722 = vshrl.u32 %v721, 7
  %724 = vset.pattern.permute.xlu0 %v722
  %725 = vperm.xlu0 %724, %v720
  %v726 = vpop.permute.xlu0 %725
  %v727 = vperm.slane %v711, 2
  %v728 = vlaneseq
  %v729 = vshrl.u32 %v728, 7
  %731 = vset.pattern.permute.xlu0 %v729
  %732 = vperm.xlu0 %731, %v727
  %v733 = vpop.permute.xlu0 %732
  %v734 = vperm.slane %v711, 3
  %v735 = vlaneseq
  %v736 = vshrl.u32 %v735, 7
  %738 = vset.pattern.permute.xlu0 %v736
  %739 = vperm.xlu0 %738, %v734
  %v740 = vpop.permute.xlu0 %739
  %v741 = vperm.slane %v711, 4
  %v742 = vlaneseq
  %v743 = vshrl.u32 %v742, 7
  %745 = vset.pattern.permute.xlu0 %v743
  %746 = vperm.xlu0 %745, %v741
  %v747 = vpop.permute.xlu0 %746
  %v748 = vperm.slane %v711, 5
  %v749 = vlaneseq
  %v750 = vshrl.u32 %v749, 7
  %752 = vset.pattern.permute.xlu0 %v750
  %753 = vperm.xlu0 %752, %v748
  %v754 = vpop.permute.xlu0 %753
  %v755 = vperm.slane %v711, 6
  %v756 = vlaneseq
  %v757 = vshrl.u32 %v756, 7
  %759 = vset.pattern.permute.xlu0 %v757
  %760 = vperm.xlu0 %759, %v755
  %v761 = vpop.permute.xlu0 %760
  %v762 = vperm.slane %v711, 7
  %v763 = vlaneseq
  %v764 = vshrl.u32 %v763, 7
  %766 = vset.pattern.permute.xlu0 %v764
  %767 = vperm.xlu0 %766, %v762
  %v768 = vpop.permute.xlu0 %767
  %v777 = vrcp.pop %v719
  %v778 = vmul.f32 %v719, %v777
  %v779 = vsub.f32 1.0, %v778
  %v780 = vmul.f32 %v777, %v779
  %v781 = vadd.f32 %v777, %v780
  %vm782 = vweird.f32 %v719
  %vm783 = vweird.f32 %v777
  %vm784 = vmor %vm782, %vm783
  %v785 = vsel %vm784, %v777, %v781
  %v786 = vand.u32 2147483647, %v719
  %vm787 = vcmp.eq.f32.partialorder %v786, 8.507059e+37
  %v788 = vand.u32 %v719, 2147483648
  %v789 = vor.u32 1.1754944e-38, %v788
  %v790 = vsel %vm787, %v789, %v785
  %v791 = vmul.f32 %v536, %v790
  %v792 = vrcp.pop %v726
  %v793 = vmul.f32 %v726, %v792
  %v794 = vsub.f32 1.0, %v793
  %v795 = vmul.f32 %v792, %v794
  %v796 = vadd.f32 %v792, %v795
  %vm797 = vweird.f32 %v726
  %vm798 = vweird.f32 %v792
  %vm799 = vmor %vm797, %vm798
  %v800 = vsel %vm799, %v792, %v796
  %v801 = vand.u32 2147483647, %v726
  %vm802 = vcmp.eq.f32.partialorder %v801, 8.507059e+37
  %v803 = vand.u32 %v726, 2147483648
  %v804 = vor.u32 1.1754944e-38, %v803
  %v805 = vsel %vm802, %v804, %v800
  %v806 = vmul.f32 %v539, %v805
  %v807 = vrcp.pop %v733
  %v808 = vmul.f32 %v733, %v807
  %v809 = vsub.f32 1.0, %v808
  %v810 = vmul.f32 %v807, %v809
  %v811 = vadd.f32 %v807, %v810
  %vm812 = vweird.f32 %v733
  %vm813 = vweird.f32 %v807
  %vm814 = vmor %vm812, %vm813
  %v815 = vsel %vm814, %v807, %v811
  %v816 = vand.u32 2147483647, %v733
  %vm817 = vcmp.eq.f32.partialorder %v816, 8.507059e+37
  %v818 = vand.u32 %v733, 2147483648
  %v819 = vor.u32 1.1754944e-38, %v818
  %v820 = vsel %vm817, %v819, %v815
  %v821 = vmul.f32 %v542, %v820
  %v822 = vrcp.pop %v740
  %v823 = vmul.f32 %v740, %v822
  %v824 = vsub.f32 1.0, %v823
  %v825 = vmul.f32 %v822, %v824
  %v826 = vadd.f32 %v822, %v825
  %vm827 = vweird.f32 %v740
  %vm828 = vweird.f32 %v822
  %vm829 = vmor %vm827, %vm828
  %v830 = vsel %vm829, %v822, %v826
  %v831 = vand.u32 2147483647, %v740
  %vm832 = vcmp.eq.f32.partialorder %v831, 8.507059e+37
  %v833 = vand.u32 %v740, 2147483648
  %v834 = vor.u32 1.1754944e-38, %v833
  %v835 = vsel %vm832, %v834, %v830
  %v836 = vmul.f32 %v545, %v835
  %v837 = vrcp.pop %v747
  %v838 = vmul.f32 %v747, %v837
  %v839 = vsub.f32 1.0, %v838
  %v840 = vmul.f32 %v837, %v839
  %v841 = vadd.f32 %v837, %v840
  %vm842 = vweird.f32 %v747
  %vm843 = vweird.f32 %v837
  %vm844 = vmor %vm842, %vm843
  %v845 = vsel %vm844, %v837, %v841
  %v846 = vand.u32 2147483647, %v747
  %vm847 = vcmp.eq.f32.partialorder %v846, 8.507059e+37
  %v848 = vand.u32 %v747, 2147483648
  %v849 = vor.u32 1.1754944e-38, %v848
  %v850 = vsel %vm847, %v849, %v845
  %v851 = vmul.f32 %v548, %v850
  %v852 = vrcp.pop %v754
  %v853 = vmul.f32 %v754, %v852
  %v854 = vsub.f32 1.0, %v853
  %v855 = vmul.f32 %v852, %v854
  %v856 = vadd.f32 %v852, %v855
  %vm857 = vweird.f32 %v754
  %vm858 = vweird.f32 %v852
  %vm859 = vmor %vm857, %vm858
  %v860 = vsel %vm859, %v852, %v856
  %v861 = vand.u32 2147483647, %v754
  %vm862 = vcmp.eq.f32.partialorder %v861, 8.507059e+37
  %v863 = vand.u32 %v754, 2147483648
  %v864 = vor.u32 1.1754944e-38, %v863
  %v865 = vsel %vm862, %v864, %v860
  %v866 = vmul.f32 %v551, %v865
  %v867 = vrcp.pop %v761
  %v868 = vmul.f32 %v761, %v867
  %v869 = vsub.f32 1.0, %v868
  %v870 = vmul.f32 %v867, %v869
  %v871 = vadd.f32 %v867, %v870
  %vm872 = vweird.f32 %v761
  %vm873 = vweird.f32 %v867
  %vm874 = vmor %vm872, %vm873
  %v875 = vsel %vm874, %v867, %v871
  %v876 = vand.u32 2147483647, %v761
  %vm877 = vcmp.eq.f32.partialorder %v876, 8.507059e+37
  %v878 = vand.u32 %v761, 2147483648
  %v879 = vor.u32 1.1754944e-38, %v878
  %v880 = vsel %vm877, %v879, %v875
  %v881 = vmul.f32 %v554, %v880
  %v882 = vrcp.pop %v768
  %v883 = vmul.f32 %v768, %v882
  %v884 = vsub.f32 1.0, %v883
  %v885 = vmul.f32 %v882, %v884
  %v886 = vadd.f32 %v882, %v885
  %vm887 = vweird.f32 %v768
  %vm888 = vweird.f32 %v882
  %vm889 = vmor %vm887, %vm888
  %v890 = vsel %vm889, %v882, %v886
  %v891 = vand.u32 2147483647, %v768
  %vm892 = vcmp.eq.f32.partialorder %v891, 8.507059e+37
  %v893 = vand.u32 %v768, 2147483648
  %v894 = vor.u32 1.1754944e-38, %v893
  %v895 = vsel %vm892, %v894, %v890
  %v896 = vmul.f32 %v557, %v895
  %v897 = vmax.f32 %v791, -1.0
  %v898 = vmax.f32 %v806, -1.0
  %v899 = vmax.f32 %v821, -1.0
  %v900 = vmax.f32 %v836, -1.0
  %v901 = vmax.f32 %v851, -1.0
  %v902 = vmax.f32 %v866, -1.0
  %v903 = vmax.f32 %v881, -1.0
  %v904 = vmax.f32 %v896, -1.0
  %v905 = vmin.f32 %v897, 1.0
  %v906 = vmin.f32 %v898, 1.0
  %v907 = vmin.f32 %v899, 1.0
  %v908 = vmin.f32 %v900, 1.0
  %v909 = vmin.f32 %v901, 1.0
  %v910 = vmin.f32 %v902, 1.0
  %v911 = vmin.f32 %v903, 1.0
  %v912 = vmin.f32 %v904, 1.0
  %921 = vset.pattern.permute.xlu0 0
  %922 = vperm.xlu0 %921, %v905
  %v923 = vpop.permute.xlu0 %922
  %924 = vset.pattern.permute.xlu0 0
  %925 = vperm.xlu0 %924, %v906
  %v926 = vpop.permute.xlu0 %925
  %927 = vset.pattern.permute.xlu0 0
  %928 = vperm.xlu0 %927, %v907
  %v929 = vpop.permute.xlu0 %928
  %930 = vset.pattern.permute.xlu0 0
  %931 = vperm.xlu0 %930, %v908
  %v932 = vpop.permute.xlu0 %931
  %933 = vset.pattern.permute.xlu0 0
  %934 = vperm.xlu0 %933, %v909
  %v935 = vpop.permute.xlu0 %934
  %936 = vset.pattern.permute.xlu0 0
  %937 = vperm.xlu0 %936, %v910
  %v938 = vpop.permute.xlu0 %937
  %939 = vset.pattern.permute.xlu0 0
  %940 = vperm.xlu0 %939, %v911
  %v941 = vpop.permute.xlu0 %940
  %942 = vset.pattern.permute.xlu0 0
  %943 = vperm.xlu0 %942, %v912
  %v944 = vpop.permute.xlu0 %943
  %v945 = vperm.slane %v923, %v236
  %v946 = vperm.slane %v926, %v236
  %v947 = vperm.slane %v929, %v236
  %v948 = vperm.slane %v932, %v236
  %v949 = vperm.slane %v935, %v236
  %v950 = vperm.slane %v938, %v236
  %v951 = vperm.slane %v941, %v236
  %v952 = vperm.slane %v944, %v236
  %v953 = vsel %vm245, %v946, %v945
  %v954 = vsel %vm247, %v947, %v953
  %v955 = vsel %vm249, %v948, %v954
  %v956 = vsel %vm251, %v949, %v955
  %v957 = vsel %vm253, %v950, %v956
  %v958 = vsel %vm255, %v951, %v957
  %v959 = vsel %vm257, %v952, %v958
  %vm961 = vcmask 39936
  %v962 = vsel %vm961, %v959, -inf
  %963 = vmax.xlane.f32.xlu0 %v962
  %v964 = vpop.xlane.xlu0 %963
  %965 = vst.msk [vmem:[%s4] sm:$0xff] %vm515, %v964
  // Predicated region
  $region14: #{multi_arccosine_triplet_loss_soft_margin_hard.1} parent=0 // pred_check
    _
  $region15: #{multi_arccosine_triplet_loss_soft_margin_hard.1} parent=0 // pred_check_branch
    %967 = sbr.rel (0) target = $region17
  $region16: #{multi_arccosine_triplet_loss_soft_margin_hard.1} parent=0 // pred_region
    _
  $region17: #{multi_arccosine_triplet_loss_soft_margin_hard.1} parent=0 // pred_fallthru
    _
  // Predicated region
  $region18: #{multi_arccosine_triplet_loss_soft_margin_hard.1} parent=0 // pred_check
    _
  $region19: #{multi_arccosine_triplet_loss_soft_margin_hard.1} parent=0 // pred_check_branch
    %969 = sbr.rel (0) target = $region21
  $region20: #{multi_arccosine_triplet_loss_soft_margin_hard.1} parent=0 // pred_region
    _
  $region21: #{multi_arccosine_triplet_loss_soft_margin_hard.1} parent=0 // pred_fallthru
    _
  // Predicated region
  $region22: #{multi_arccosine_triplet_loss_soft_margin_hard.1} parent=0 // pred_check
    _
  $region23: #{multi_arccosine_triplet_loss_soft_margin_hard.1} parent=0 // pred_check_branch
    %971 = sbr.rel (0) target = $region25
  $region24: #{multi_arccosine_triplet_loss_soft_margin_hard.1} parent=0 // pred_region
    _
  $region25: #{multi_arccosine_triplet_loss_soft_margin_hard.1} parent=0 // pred_fallthru
    _
  // Predicated region
  $region26: #{multi_arccosine_triplet_loss_soft_margin_hard.1} parent=0 // pred_check
    _
  $region27: #{multi_arccosine_triplet_loss_soft_margin_hard.1} parent=0 // pred_check_branch
    %973 = sbr.rel (0) target = $region29
  $region28: #{multi_arccosine_triplet_loss_soft_margin_hard.1} parent=0 // pred_region
    _
  $region29: #{multi_arccosine_triplet_loss_soft_margin_hard.1} parent=0 // pred_fallthru
    _

</llo_original>
